<compile_context>
chip_gen: v6e
topology: v6e:2x2x1
jax: 0.10.0
libtpu: 0.0.40
codegen_flags: <defaults>
</compile_context>

<pallas_src>
import math

import jax
import jax.numpy as jnp
from jax.experimental import pallas as pl
from jax.experimental.pallas import tpu as pltpu

_MIB = 1024 * 1024


def _vmem_capacity_bytes():
    try:
        info = pltpu.get_tpu_info()
        cap = getattr(info, "vmem_capacity_bytes", None)
        if cap:
            return int(cap)
    except Exception:
        pass
    return 128 * _MIB


def _block_budget_bytes():
    # Per-block budget; in+out double-buffered -> ~4x this resident in VMEM.
    # v7x (64 MiB VMEM, ~3.2 TB/s HBM) wants bigger blocks so the fixed
    # ~0.35us/step pipeline overhead stays small relative to the DMA time;
    # 4 x 6 MiB = 24 MiB still fits comfortably under the 32 MiB scoped limit.
    if _vmem_capacity_bytes() <= 64 * _MIB:
        return 6 * _MIB
    return 4 * _MIB


def _sublane_unit(itemsize):
    # Native sublane packing: f32 -> 8, bf16/f16 -> 16, int8/fp8 -> 32.
    return {4: 8, 2: 16, 1: 32}.get(itemsize, 8)


def _largest_divisor_multiple(dim, unit, cap):
    """Largest t <= cap with t % unit == 0 and dim % t == 0 (None if none)."""
    t = min(cap, dim)
    t -= t % unit
    while t >= unit:
        if dim % t == 0:
            return t
        t -= unit
    return None


def _pick_row_tile(n, itemsize, row_cap):
    """Row tile: a multiple of the dtype-native sublane unit (or 8) that
    divides n and is <= row_cap; falls back to full n (exempt from the
    (8,128) divisibility rule)."""
    for unit in (_sublane_unit(itemsize), 8):
        if n % unit == 0:
            t = _largest_divisor_multiple(n, unit, min(n, max(unit, row_cap)))
            if t is not None:
                return t
    return n


def _add_inverse_tiled_kernel(x_ref, o_ref):
    # Grid: (row_blocks, lane_blocks, 2).  h == 0 -> "x" half, h == 1 -> "1-x".
    h = pl.program_id(2)
    one = jnp.ones((), dtype=x_ref.dtype)

    @pl.when(h == 0)
    def _():
        o_ref[...] = x_ref[...]

    @pl.when(h != 0)
    def _():
        o_ref[...] = one - x_ref[...]


def _add_inverse_tiled(x2):
    n, L = x2.shape
    itemsize = jnp.dtype(x2.dtype).itemsize
    budget = _block_budget_bytes()
    sub_unit = _sublane_unit(itemsize)

    # Lane tile first (lane-dense unmasked stores are the biggest lever);
    # leave room for at least one native sublane group inside the budget.
    lane_cap = max(128, budget // (sub_unit * itemsize))
    tl = _largest_divisor_multiple(L, 128, min(L, lane_cap)) or L
    # Grow the row tile to fill the remaining block budget.
    row_cap = max(1, budget // (tl * itemsize))
    tn = _pick_row_tile(n, itemsize, row_cap)
    if tn * tl * itemsize > budget:
        # Forced full-extent rows (n not a multiple of 8) blew the budget:
        # shrink the lane tile instead.
        lane_cap = max(128, budget // (max(tn, 1) * itemsize))
        tl = _largest_divisor_multiple(L, 128, min(L, lane_cap)) or 128

    nj = L // tl
    grid = (n // tn, nj, 2)

    return pl.pallas_call(
        _add_inverse_tiled_kernel,
        out_shape=jax.ShapeDtypeStruct((n, 2 * L), x2.dtype),
        grid_spec=pltpu.PrefetchScalarGridSpec(
            num_scalar_prefetch=0,
            grid=grid,
            in_specs=[pl.BlockSpec((tn, tl), lambda i, j, h: (i, j))],
            out_specs=pl.BlockSpec(
                (tn, tl), lambda i, j, h, nj=nj: (i, h * nj + j)
            ),
        ),
        compiler_params=pltpu.CompilerParams(
            dimension_semantics=("parallel", "parallel", "arbitrary"),
            vmem_limit_bytes=32 * _MIB,
        ),
        cost_estimate=pl.CostEstimate(
            flops=n * L,
            transcendentals=0,
            bytes_accessed=3 * n * L * itemsize,
        ),
    )(x2)


def _add_inverse_small(x2):
    # Fallback for flattened lengths not divisible by 128: full-width rows
    # (exempt from the (8,128) rule), row tile bounded by the VMEM budget.
    n, L = x2.shape
    itemsize = jnp.dtype(x2.dtype).itemsize
    budget = _block_budget_bytes()

    # Per grid step: (tn, L) input + (tn, 2L) output = 3*tn*L elements.
    row_cap = max(1, budget // max(1, 3 * L * itemsize))
    tn = _pick_row_tile(n, itemsize, row_cap)
    grid = (n // tn,)

    step_bytes = 3 * tn * L * itemsize
    vmem_limit = max(32 * _MIB, 2 * step_bytes + 4 * _MIB)
    vmem_limit = min(vmem_limit,
                     max(32 * _MIB, _vmem_capacity_bytes() - 16 * _MIB))

    def kernel(x_ref, o_ref):
        x = x_ref[...]
        one = jnp.ones((), dtype=x.dtype)
        # Two sliced stores instead of an in-kernel concatenate (no (tn, 2L)
        # temporary; stores go straight into the output ref's halves).
        o_ref[:, :L] = x
        o_ref[:, L:] = one - x

    return pl.pallas_call(
        kernel,
        out_shape=jax.ShapeDtypeStruct((n, 2 * L), x2.dtype),
        grid_spec=pltpu.PrefetchScalarGridSpec(
            num_scalar_prefetch=0,
            grid=grid,
            in_specs=[pl.BlockSpec((tn, L), lambda i: (i, 0))],
            out_specs=pl.BlockSpec((tn, 2 * L), lambda i: (i, 0)),
        ),
        compiler_params=pltpu.CompilerParams(
            dimension_semantics=("parallel",),
            vmem_limit_bytes=int(vmem_limit),
        ),
        cost_estimate=pl.CostEstimate(
            flops=n * L,
            transcendentals=0,
            bytes_accessed=3 * n * L * itemsize,
        ),
    )(x2)


def add_inverse(x: jax.Array) -> jax.Array:
    """Pallas equivalent of AddInverse(dim=1): concat([x, 1 - x], axis=1)."""
    # TODO(synk): only dim=1 (the module default) is implemented.
    if x.ndim < 2:
        raise ValueError("add_inverse expects an input with a channel axis")
    n = x.shape[0]
    rest = x.shape[1:]
    L = int(math.prod(rest))
    out_shape = (n, 2 * rest[0]) + tuple(rest[1:])

    if n == 0 or L == 0:
        return jnp.zeros(out_shape, dtype=x.dtype)

    x2 = x.reshape(n, L)
    if L % 128 == 0:
        out2 = _add_inverse_tiled(x2)
    else:
        out2 = _add_inverse_small(x2)
    return out2.reshape(out_shape)


if __name__ == "__main__":
    key = jax.random.PRNGKey(0)
    # Small NCHW input: batch=2, channels=4, spatial=16x16 (L = 1024, tiled path)
    x = jax.random.uniform(key, (2, 4, 16, 16), dtype=jnp.float32)

    out = add_inverse(x)
    out = jax.block_until_ready(out)

    # Reference (same semantics as torch.cat([x, 1 - x], dim=1))
    ref = jnp.concatenate([x, 1.0 - x], axis=1)
    assert out.shape == (2, 8, 16, 16), out.shape
    assert out.dtype == x.dtype
    assert jnp.allclose(out, ref), "mismatch vs reference"

    # Also exercise the fallback path (L = 4*3*3 = 36, not a multiple of 128).
    x_small = jax.random.uniform(jax.random.PRNGKey(0), (2, 4, 3, 3),
                                 dtype=jnp.float32)
    out_small = jax.block_until_ready(add_inverse(x_small))
    ref_small = jnp.concatenate([x_small, 1.0 - x_small], axis=1)
    assert out_small.shape == (2, 8, 3, 3), out_small.shape
    assert jnp.allclose(out_small, ref_small), "fallback mismatch vs reference"

    print("KERNEL_OK")
</pallas_src>

<mosaic_0001>
module attributes {stable_mosaic.version = 11 : i64} {
  func.func @_add_inverse_tiled_kernel(%arg0: i32, %arg1: i32, %arg2: i32, %arg3: memref<2x1024xf32, #tpu.memory_space<vmem>>, %arg4: memref<2x1024xf32, #tpu.memory_space<vmem>>) attributes {dimension_semantics = [#tpu.dimension_semantics<parallel>, #tpu.dimension_semantics<parallel>, #tpu.dimension_semantics<arbitrary>], iteration_bounds = array<i64: 1, 1, 2>, scalar_prefetch = 0 : i64, scratch_operands = 0 : i64, tpu.core_type = #tpu.core_type<tc>, window_params = [{transform_indices = @transform_0, window_bounds = array<i64: 2, 1024>}, {transform_indices = @transform_1, window_bounds = array<i64: 2, 1024>}]} {
    %c0_i32 = arith.constant 0 : i32
    %0 = arith.cmpi eq, %arg2, %c0_i32 : i32
    %1 = arith.extui %0 : i1 to i32
    %c0_i32_0 = arith.constant 0 : i32
    %2 = arith.cmpi ne, %1, %c0_i32_0 : i32
    scf.if %2 {
      %c0 = arith.constant 0 : index
      %c0_3 = arith.constant 0 : index
      %6 = vector.load %arg3[%c0, %c0_3] : memref<2x1024xf32, #tpu.memory_space<vmem>>, vector<2x1024xf32>
      %c0_4 = arith.constant 0 : index
      %c0_5 = arith.constant 0 : index
      %7 = vector.load %arg4[%c0_4, %c0_5] : memref<2x1024xf32, #tpu.memory_space<vmem>>, vector<2x1024xf32>
      tpu.vector_store %arg4[%c0_4, %c0_5], %6 {strides = array<i32>} : memref<2x1024xf32, #tpu.memory_space<vmem>>, vector<2x1024xf32>,
    } else {
    }
    %c0_i32_1 = arith.constant 0 : i32
    %3 = arith.cmpi ne, %arg2, %c0_i32_1 : i32
    %4 = arith.extui %3 : i1 to i32
    %cst = arith.constant 1.000000e+00 : f32
    %c0_i32_2 = arith.constant 0 : i32
    %5 = arith.cmpi ne, %4, %c0_i32_2 : i32
    scf.if %5 {
      %c0 = arith.constant 0 : index
      %c0_3 = arith.constant 0 : index
      %6 = vector.load %arg3[%c0, %c0_3] : memref<2x1024xf32, #tpu.memory_space<vmem>>, vector<2x1024xf32>
      %7 = vector.broadcast %cst : f32 to vector<2x1024xf32>
      %8 = arith.subf %7, %6 : vector<2x1024xf32>
      %c0_4 = arith.constant 0 : index
      %c0_5 = arith.constant 0 : index
      %9 = vector.load %arg4[%c0_4, %c0_5] : memref<2x1024xf32, #tpu.memory_space<vmem>>, vector<2x1024xf32>
      tpu.vector_store %arg4[%c0_4, %c0_5], %8 {strides = array<i32>} : memref<2x1024xf32, #tpu.memory_space<vmem>>, vector<2x1024xf32>,
    } else {
    }
    return
  }
  func.func @transform_0(%arg0: i32, %arg1: i32, %arg2: i32) -> (i32, i32) {
    %c0_i32 = arith.constant 0 : i32
    return %arg0, %arg1 : i32, i32
  }
  func.func @transform_1(%arg0: i32, %arg1: i32, %arg2: i32) -> (i32, i32) {
    %c1_i32 = arith.constant 1 : i32
    %0 = arith.muli %arg2, %c1_i32 : i32
    %1 = arith.addi %0, %arg1 : i32
    %c0_i32 = arith.constant 0 : i32
    return %arg0, %1 : i32, i32
  }
}

</mosaic_0001>

<llo_original>
// kernel: tpu_custom_call.1
$region0: #{tpu_custom_call.1}
  #allocation0 [shape = 'u32[]', space=smem, size = 0x4, offset = 0x4, fixed_abs, tag = 'smem constant byte address 0x4 - core index']
  #allocation1 [shape = 'u32[144,128]{1,0:T(1,128)}', space=vmem, size = 0x12000, scoped, tag = 'internal scratch']
  %s0 = inlined_call_operand.hbm [shape: f32[2,1024], index: 0, kind: input, shape index: {}]
  %s1 = inlined_call_operand.hbm [shape: f32[2,2048], index: 1, kind: output, shape index: {}]
  %s2 = sld [smem:[#allocation0]]
  $region49: #{tpu_custom_call.1} parent=0
    _
  %s4 = ssub.s32 1, %s2
  %s5 = scalar_select 0, %s4, %s2
  $region1: #{tpu_custom_call.1} parent=0
    #allocation2 [shape = 'u8[8192]{0}', space=vmem, size = 0x2000, scoped, tag = 'input window, operand 0, single buffered']
    #allocation3 [shape = 's32[2]{0}', space=sflag, size = 0x8, scoped, tag = 'scoped memory for tpu_custom_call.1']
    #allocation4 [shape = 's32[2]{0}', space=sflag, size = 0x8, scoped, tag = 'scoped memory for tpu_custom_call.1']
    #allocation5 [shape = 'u8[16384]{0}', space=vmem, size = 0x4000, scoped, tag = 'output window, operand 0']
    %6 = vsyncpa [#allocation3], 0
    %7 = vsyncpa [#allocation4], 0
    %s8 = scalar_lea.sflag [#allocation4], 1
    %9 = vsyncpa %s8, 0
    loop: start=0, step=1, limit=4
    $region2: #{tpu_custom_call.1} parent=1 // loop_pre_header
      _
    $region3: #{tpu_custom_call.1} parent=1 // loop_header
      %s11 = sphi 0, %s15
      %p12 = scmp.ge.s32.totalorder %s11, 4
      %s18 = sphi 0, %s37
      %s19 = sphi 0, %s33
      %s20 = sphi 0, %s29
      %s21 = sphi 0, %s18
      %s22 = sphi 0, %s19
      %s23 = sphi 0, %s20
      %s24 = sphi 0, %s21
      %s25 = sphi 0, %s22
      %s26 = sphi 0, %s23
      %s42 = sphi 0, %s44
      %s45 = sphi 0, %s42
      %s46 = sphi 0, %s45
      %s62 = sphi 0, %s46
      %s72 = sphi 0, %s74
      %s75 = sphi 0, %s72
      %s76 = sphi 0, %s75
      %s92 = sphi 0, %s76
    $region4: #{tpu_custom_call.1} parent=1 // loop_header_branch
      %14 = sbr.rel (%p12) target = $region8
    $region5: #{tpu_custom_call.1} parent=1 // loop_body
      %s16 = ssub.s32 %s11, 1
      %s17 = ssub.s32 %s11, 2
      %s27 = sadd.s32 1, %s20
      %p28 = scmp.ge.s32.totalorder %s27, 2
      %s29 = scalar_select %p28, 0, %s27
      %s30 = sadd.s32 1, %s19
      %s31 = scalar_select %p28, %s30, %s19
      %p32 = scmp.ge.s32.totalorder %s31, 1
      %s33 = scalar_select %p32, 0, %s31
      %s34 = sadd.s32 1, %s18
      %s35 = scalar_select %p32, %s34, %s18
      %p36 = scmp.ge.s32.totalorder %s35, 1
      %s37 = scalar_select %p36, 0, %s35
      %s38 = ssub.s32 %s18, %s37
      %s39 = ssub.s32 %s19, %s33
      %s40 = sor.u32 %s38, %s39
      %p41 = scmp.eq.s32.totalorder %s40, 0
      %s43 = sadd.s32 %s42, 1
      %s44 = scalar_select %p41, %s42, %s43
      %p47 = pneg %p41
      %p48 = scmp.eq.s32.totalorder %s11, 1
      %p49 = por %p47, %p48
      %p50 = scmp.ne.s32.totalorder %s42, %s45
      %p51 = scmp.eq.s32.totalorder %s11, 0
      %p52 = por %p50, %p51
      %p53 = scmp.ne.s32.totalorder %s42, %s45
      %p54 = scmp.eq.s32.totalorder %s16, 1
      %p55 = por %p53, %p54
      %p56 = scmp.ne.s32.totalorder %s45, %s46
      %p57 = scmp.eq.s32.totalorder %s16, 0
      %p58 = por %p56, %p57
      %p59 = scmp.ne.s32.totalorder %s45, %s46
      %p60 = scmp.eq.s32.totalorder %s17, 1
      %p61 = por %p59, %p60
      %p63 = scmp.ne.s32.totalorder %s46, %s62
      %p64 = scmp.eq.s32.totalorder %s17, 0
      %p65 = por %p63, %p64
      %s66 = sadd.s32 %s20, %s19
      %s67 = sadd.s32 %s29, %s33
      %s68 = ssub.s32 %s18, %s37
      %s69 = ssub.s32 %s66, %s67
      %s70 = sor.u32 %s68, %s69
      %p71 = scmp.eq.s32.totalorder %s70, 0
      %s73 = sadd.s32 %s72, 1
      %s74 = scalar_select %p71, %s72, %s73
      %p77 = pneg %p71
      %p78 = scmp.eq.s32.totalorder %s11, 1
      %p79 = por %p77, %p78
      %p80 = scmp.ne.s32.totalorder %s72, %s75
      %p81 = scmp.eq.s32.totalorder %s11, 0
      %p82 = por %p80, %p81
      %p83 = scmp.ne.s32.totalorder %s72, %s75
      %p84 = scmp.eq.s32.totalorder %s16, 1
      %p85 = por %p83, %p84
      %p86 = scmp.ne.s32.totalorder %s75, %s76
      %p87 = scmp.eq.s32.totalorder %s16, 0
      %p88 = por %p86, %p87
      %p89 = scmp.ne.s32.totalorder %s75, %s76
      %p90 = scmp.eq.s32.totalorder %s17, 1
      %p91 = por %p89, %p90
      %p93 = scmp.ne.s32.totalorder %s76, %s92
      %p94 = scmp.eq.s32.totalorder %s17, 0
      %p95 = por %p93, %p94
      %p96 = scmp.le.s32.totalorder 1, %s11
      %p97 = scmp.lt.s32.totalorder %s11, 3
      %p98 = pnand %p96, %p97
      %p99 = pneg %p98
      // Predicated region
      $region9: #{tpu_custom_call.1} parent=5 // pred_check
        _
      $region10: #{tpu_custom_call.1} parent=5 // pred_check_branch
        %101 = sbr.rel (%p98) target = $region12
      $region11: #{tpu_custom_call.1} parent=5 // pred_region
        %s102 = ssub.s32 %s11, 1
        // Predicated region
        $region13: #{tpu_custom_call.1} parent=11 // pred_check
          %p103 = pneg %p58
        $region14: #{tpu_custom_call.1} parent=11 // pred_check_branch
          %105 = sbr.rel (%p103) target = $region16
        $region15: #{tpu_custom_call.1} parent=11 // pred_region
          %s106 = smul.u32 8, %s22
          %s108 = ssub.s32 256, 256
          %109 = vsyncadd [#allocation3], %s108
          %s110 = smul.addr %s21, 8
          %s111 = sadd.s32 %s106, %s110
          %s112 = smul.addr %s111, 32
          %s113 = scalar_lea.hbm %s0, %s112
          %s115 = sshll.u32 [#allocation2], 4
          %s116 = int_to_ptr.vmem [resolvable:$true] %s115
          %118 = dma.hbm_to_vmem [thread:$0]  %s113, 256, %s116, [#allocation3]
        $region16: #{tpu_custom_call.1} parent=11 // pred_fallthru
          _
      $region12: #{tpu_custom_call.1} parent=5 // pred_fallthru
        _
      %p119 = scmp.lt.s32.totalorder %s11, 2
      // Predicated region
      $region17: #{tpu_custom_call.1} parent=5 // pred_check
        %p120 = pneg %p119
      $region18: #{tpu_custom_call.1} parent=5 // pred_check_branch
        %122 = sbr.rel (%p120) target = $region20
      $region19: #{tpu_custom_call.1} parent=5 // pred_region
        _
      $region20: #{tpu_custom_call.1} parent=5 // pred_fallthru
        _
      %p123 = scmp.le.s32.totalorder 1, %s11
      %p124 = scmp.lt.s32.totalorder %s11, 3
      %p125 = pnand %p123, %p124
      %p126 = pneg %p125
      // Predicated region
      $region21: #{tpu_custom_call.1} parent=5 // pred_check
        _
      $region22: #{tpu_custom_call.1} parent=5 // pred_check_branch
        %128 = sbr.rel (%p125) target = $region24
      $region23: #{tpu_custom_call.1} parent=5 // pred_region
        %s129 = ssub.s32 %s11, 1
        // Predicated region
        $region25: #{tpu_custom_call.1} parent=23 // pred_check
          %p130 = pneg %p58
        $region26: #{tpu_custom_call.1} parent=23 // pred_check_branch
          %132 = sbr.rel (%p130) target = $region28
        $region27: #{tpu_custom_call.1} parent=23 // pred_region
          %133 = dma.done [#allocation3], 256
        $region28: #{tpu_custom_call.1} parent=23 // pred_fallthru
          _
        %p134 = pneg %p58
        %p135 = pneg %p55
        %p136 = pneg %p88
        %p137 = pneg %p85
        %s138 = sand.u32 %s75, 1
        %s139 = scalar_lea.sflag [#allocation4], %s138
        %s140 = sand.u32 %s75, 1
        %s141 = smul.addr %s140, 16
        %s142 = scalar_lea.vmem [#allocation5], %s141
        %s143 = smul.u32 8, %s22
        %s144 = sadd.s32 %s23, %s22
        %s145 = smul.u32 8, %s144
        %p146 = scmp.eq.s32.totalorder %s23, 0
        // Predicated region
        $region29: #{tpu_custom_call.1} parent=23 // pred_check
          %p147 = pneg %p146
        $region30: #{tpu_custom_call.1} parent=23 // pred_check_branch
          %149 = sbr.rel (%p147) target = $region32
        $region31: #{tpu_custom_call.1} parent=23 // pred_region
          %v150 = vld [vmem:[#allocation2] sm:$0xff]
          %v151 = vld [vmem:[#allocation2 + $0x8] sm:$0xff]
          %152 = vst [vmem:[%s142] sm:$0xff] %v150
          %153 = vst [vmem:[%s142 + $0x8] sm:$0xff] %v151
        $region32: #{tpu_custom_call.1} parent=23 // pred_fallthru
          _
        %p154 = scmp.ne.s32.totalorder %s23, 0
        // Predicated region
        $region33: #{tpu_custom_call.1} parent=23 // pred_check
          %p155 = pneg %p154
        $region34: #{tpu_custom_call.1} parent=23 // pred_check_branch
          %157 = sbr.rel (%p155) target = $region36
        $region35: #{tpu_custom_call.1} parent=23 // pred_region
          %v158 = vld [vmem:[#allocation2] sm:$0xff]
          %v159 = vld [vmem:[#allocation2 + $0x8] sm:$0xff]
          %v160 = vsub.f32 1.0, %v158
          %v161 = vsub.f32 1.0, %v159
          %162 = vst [vmem:[%s142] sm:$0xff] %v160
          %163 = vst [vmem:[%s142 + $0x8] sm:$0xff] %v161
        $region36: #{tpu_custom_call.1} parent=23 // pred_fallthru
          _
        %s164 = sand.u32 %s75, 1
        %s165 = scalar_lea.sflag [#allocation4], %s164
        %s166 = sand.u32 %s75, 1
        %s167 = smul.addr %s166, 16
        %s168 = scalar_lea.vmem [#allocation5], %s167
        // Predicated region
        $region37: #{tpu_custom_call.1} parent=23 // pred_check
          %p169 = pneg %p85
        $region38: #{tpu_custom_call.1} parent=23 // pred_check_branch
          %171 = sbr.rel (%p169) target = $region40
        $region39: #{tpu_custom_call.1} parent=23 // pred_region
          %s172 = sadd.s32 %s23, %s22
          %s173 = smul.u32 8, %s172
          %s175 = ssub.s32 256, 256
          %176 = vsyncadd %s165, %s175
          %s177 = smul.addr %s21, 16
          %s178 = sadd.s32 %s173, %s177
          %s179 = smul.addr %s178, 32
          %s180 = scalar_lea.hbm %s1, %s179
          %s182 = sshll.u32 %s168, 4
          %s183 = int_to_ptr.vmem [resolvable:$true] %s182
          %185 = dma.vmem_to_hbm [thread:$0]  %s183, 256, %s180, %s165
        $region40: #{tpu_custom_call.1} parent=23 // pred_fallthru
          _
      $region24: #{tpu_custom_call.1} parent=5 // pred_fallthru
        _
      %p186 = scmp.le.s32.totalorder 2, %s11
      // Predicated region
      $region41: #{tpu_custom_call.1} parent=5 // pred_check
        %p187 = pneg %p186
      $region42: #{tpu_custom_call.1} parent=5 // pred_check_branch
        %189 = sbr.rel (%p187) target = $region44
      $region43: #{tpu_custom_call.1} parent=5 // pred_region
        %s190 = ssub.s32 %s11, 2
        // Predicated region
        $region45: #{tpu_custom_call.1} parent=43 // pred_check
          %p191 = pneg %p91
        $region46: #{tpu_custom_call.1} parent=43 // pred_check_branch
          %193 = sbr.rel (%p191) target = $region48
        $region47: #{tpu_custom_call.1} parent=43 // pred_region
          %s194 = sand.u32 %s76, 1
          %s195 = scalar_lea.sflag [#allocation4], %s194
          %s196 = sand.u32 %s76, 1
          %s197 = smul.addr %s196, 16
          %s198 = scalar_lea.vmem [#allocation5], %s197
          %199 = dma.done %s195, 256
        $region48: #{tpu_custom_call.1} parent=43 // pred_fallthru
          _
      $region44: #{tpu_custom_call.1} parent=5 // pred_fallthru
        _
    $region6: #{tpu_custom_call.1} parent=1 // loop_footer
      %s15 = sadd.s32 1, %s11
    $region7: #{tpu_custom_call.1} parent=1 // loop_footer_branch
      %10 = sbr.rel target = $region3
    $region8: #{tpu_custom_call.1} parent=1 // loop_exit
      _
    %200 = vsyncpa [#allocation3], 1
    %s201 = scalar_lea.sflag [#allocation3], 1
    %202 = vsyncpa %s201, 1
    %203 = vsyncpa [#allocation4], 1
    %s204 = scalar_lea.sflag [#allocation4], 1
    %205 = vsyncpa %s204, 1

</llo_original>
